<compile_context>
chip_gen: v7x
topology: tpu7x:2x2x1
jax: 0.10.0
libtpu: 0.0.40
codegen_flags: <defaults>
</compile_context>

<pallas_src>
import jax
import jax.numpy as jnp
from jax.experimental import pallas as pl
from jax.experimental.pallas import tpu as pltpu

IN_FEATURES = 10
HID_FEATURES = 10
OUT_FEATURES = 5

HID_PAD = 16          # hidden lanes (narrow on purpose; MXU has huge slack)
OUT_PAD = 8           # output lanes (out_features rounded up to 8)
P1_ROWS = 24          # rows 0..9: w1^T (zero-padded), row 16: b1
P2_ROWS = 24          # rows 0..15: w2^T (zero-padded), row 16: b2
B1_ROW = 16
B2_ROW = 16


def _round_up(n, m):
    return ((n + m - 1) // m) * m


def mlp_kernel(x_ref, p1_ref, p2_ref, o_ref):
    # x_ref: (TB, IN_FEATURES) io dtype; p1_ref: (P1_ROWS, HID_PAD) io dtype;
    # p2_ref: (P2_ROWS, OUT_PAD) io dtype; o_ref: (TB, OUT_PAD) f32.
    x = x_ref[...]
    w1 = p1_ref[0:IN_FEATURES, :]                              # (10, 16) = w1^T padded
    b1 = p1_ref[B1_ROW:B1_ROW + 1, :].astype(jnp.float32)      # (1, 16)
    w2 = p2_ref[0:HID_PAD, :]                                  # (16, 8) = w2^T padded
    b2 = p2_ref[B2_ROW:B2_ROW + 1, :].astype(jnp.float32)      # (1, 8)

    h = jnp.dot(x, w1, preferred_element_type=jnp.float32) + b1   # f32 accumulate
    h = jnp.maximum(h, 0.0)                                        # ReLU in f32
    y = jnp.dot(h.astype(w2.dtype), w2,
                preferred_element_type=jnp.float32) + b2
    o_ref[...] = y.astype(o_ref.dtype)


def pack_params(w1, b1, w2, b2, dtype):
    """Pack PyTorch-layout params (out,in) + biases into two small lane-dense buffers."""
    p1 = jnp.zeros((P1_ROWS, HID_PAD), jnp.float32)
    p1 = p1.at[: w1.shape[1], : w1.shape[0]].set(w1.T)         # w1^T : (in, hid)
    p1 = p1.at[B1_ROW, : b1.size].set(b1.reshape(-1))
    p2 = jnp.zeros((P2_ROWS, OUT_PAD), jnp.float32)
    p2 = p2.at[: w2.shape[1], : w2.shape[0]].set(w2.T)         # w2^T : (hid, out)
    p2 = p2.at[B2_ROW, : b2.size].set(b2.reshape(-1))
    return p1.astype(dtype), p2.astype(dtype)


def _choose_tb(batch, tb_max):
    steps = pl.cdiv(batch, tb_max)
    if batch >= 16:
        steps = max(steps, 2)      # >=2 grid steps so v7x's two TCs both get work
    return _round_up(pl.cdiv(batch, steps), 8)


def toy_model_forward(x, w1, b1, w2, b2, *, io_dtype=jnp.float32, tb=2048):
    B, in_features = x.shape
    out_features = w2.shape[0]

    TB = _choose_tb(B, tb)
    BP = _round_up(B, TB)
    grid = (BP // TB,)

    x_io = x.astype(io_dtype)
    if BP != B:                    # pad batch rows only when strictly needed
        x_io = jnp.zeros((BP, in_features), io_dtype).at[:B, :].set(x_io)
    p1, p2 = pack_params(w1, b1, w2, b2, io_dtype)

    flops = 2 * BP * (in_features * HID_PAD + HID_PAD * OUT_PAD)
    bytes_accessed = (x_io.size * x_io.dtype.itemsize
                      + p1.size * p1.dtype.itemsize           # params counted once
                      + p2.size * p2.dtype.itemsize
                      + BP * OUT_PAD * 4)                     # f32 output

    out = pl.pallas_call(
        mlp_kernel,
        out_shape=jax.ShapeDtypeStruct((BP, OUT_PAD), jnp.float32),
        grid=grid,
        in_specs=[
            pl.BlockSpec((TB, in_features), lambda i: (i, 0)),    # x: tiled over batch
            pl.BlockSpec((P1_ROWS, HID_PAD), lambda i: (0, 0)),   # params: same block each step
            pl.BlockSpec((P2_ROWS, OUT_PAD), lambda i: (0, 0)),
        ],
        out_specs=pl.BlockSpec((TB, OUT_PAD), lambda i: (i, 0)),  # narrow f32 output
        compiler_params=pltpu.CompilerParams(
            dimension_semantics=("parallel",)),
        cost_estimate=pl.CostEstimate(
            flops=flops, transcendentals=0, bytes_accessed=bytes_accessed),
    )(x_io, p1, p2)

    return out[:B, :out_features]


def init_params(key):
    # Mirror torch.nn.Linear default init: U(-1/sqrt(fan_in), 1/sqrt(fan_in)).
    k1, k2, k3, k4 = jax.random.split(key, 4)
    bound1 = 1.0 / jnp.sqrt(10.0)
    w1 = jax.random.uniform(k1, (10, 10), jnp.float32, -bound1, bound1)
    b1 = jax.random.uniform(k2, (1, 10), jnp.float32, -bound1, bound1)
    bound2 = 1.0 / jnp.sqrt(10.0)
    w2 = jax.random.uniform(k3, (5, 10), jnp.float32, -bound2, bound2)
    b2 = jax.random.uniform(k4, (1, 5), jnp.float32, -bound2, bound2)
    return w1, b1, w2, b2


if __name__ == "__main__":
    key = jax.random.PRNGKey(0)
    kx, kp, kx2 = jax.random.split(key, 3)

    w1, b1, w2, b2 = init_params(kp)

    # --- f32 path (default): exact semantics of the original torch module ---
    batch = 8
    x = jax.random.normal(kx, (batch, 10), jnp.float32)
    out_f32 = jax.block_until_ready(toy_model_forward(x, w1, b1, w2, b2))
    ref = jnp.maximum(x @ w1.T + b1, 0.0) @ w2.T + b2
    assert out_f32.shape == (batch, 5)
    assert jnp.allclose(out_f32, ref, atol=1e-5, rtol=1e-5)

    # --- f32 path with a batch that exercises multiple grid steps + padding ---
    batch2 = 40
    x2 = jax.random.normal(kx2, (batch2, 10), jnp.float32)
    out2 = jax.block_until_ready(toy_model_forward(x2, w1, b1, w2, b2))
    ref2 = jnp.maximum(x2 @ w1.T + b1, 0.0) @ w2.T + b2
    assert out2.shape == (batch2, 5)
    assert jnp.allclose(out2, ref2, atol=1e-5, rtol=1e-5)

    # --- optional bf16-I/O path (bandwidth-optimized): compare against a
    #     reference that applies the SAME roundings the kernel does
    #     (bf16 inputs/weights/biases, f32 accumulation, bf16 re-round of the
    #     hidden activation before the second matmul) ---
    out_bf16 = jax.block_until_ready(
        toy_model_forward(x, w1, b1, w2, b2, io_dtype=jnp.bfloat16))
    up = lambda a: a.astype(jnp.bfloat16).astype(jnp.float32)
    h_ref = jnp.maximum(up(x) @ up(w1).T + up(b1), 0.0)
    ref_b = up(h_ref) @ up(w2).T + up(b2)
    assert out_bf16.shape == (batch, 5)
    assert jnp.allclose(out_bf16, ref_b, atol=2e-3, rtol=2e-2)

    print("KERNEL_OK")
</pallas_src>

<mosaic_0001>
module attributes {stable_mosaic.version = 11 : i64} {
  func.func @mlp_kernel(%arg0: i32, %arg1: memref<8x10xf32, #tpu.memory_space<vmem>>, %arg2: memref<24x16xf32, #tpu.memory_space<vmem>>, %arg3: memref<24x8xf32, #tpu.memory_space<vmem>>, %arg4: memref<8x8xf32, #tpu.memory_space<vmem>>) attributes {dimension_semantics = [#tpu.dimension_semantics<parallel>], iteration_bounds = array<i64: 1>, scalar_prefetch = 0 : i64, scratch_operands = 0 : i64, tpu.core_type = #tpu.core_type<tc>, window_params = [{transform_indices = @transform_0, window_bounds = array<i64: 8, 10>}, {pipeline_mode = #tpu.pipeline_mode<synchronous>, transform_indices = @transform_1, window_bounds = array<i64: 24, 16>}, {pipeline_mode = #tpu.pipeline_mode<synchronous>, transform_indices = @transform_2, window_bounds = array<i64: 24, 8>}, {transform_indices = @transform_3, window_bounds = array<i64: 8, 8>}]} {
    %c0 = arith.constant 0 : index
    %c0_0 = arith.constant 0 : index
    %0 = vector.load %arg1[%c0, %c0_0] : memref<8x10xf32, #tpu.memory_space<vmem>>, vector<8x10xf32>
    %c0_1 = arith.constant 0 : index
    %c0_2 = arith.constant 0 : index
    %1 = vector.load %arg2[%c0_1, %c0_2] : memref<24x16xf32, #tpu.memory_space<vmem>>, vector<10x16xf32>
    %c16 = arith.constant 16 : index
    %c0_3 = arith.constant 0 : index
    %2 = vector.load %arg2[%c16, %c0_3] : memref<24x16xf32, #tpu.memory_space<vmem>>, vector<1x16xf32>
    %c0_4 = arith.constant 0 : index
    %c0_5 = arith.constant 0 : index
    %3 = vector.load %arg3[%c0_4, %c0_5] : memref<24x8xf32, #tpu.memory_space<vmem>>, vector<16x8xf32>
    %c16_6 = arith.constant 16 : index
    %c0_7 = arith.constant 0 : index
    %4 = vector.load %arg3[%c16_6, %c0_7] : memref<24x8xf32, #tpu.memory_space<vmem>>, vector<1x8xf32>
    %cst = arith.constant dense<0.000000e+00> : vector<8x16xf32>
    %5 = tpu.matmul %0, %1, %cst {dimension_numbers = #tpu.dot_dimension_numbers<[1], [0], [0], [1], [0, 0, 1, 1], [], []>} : vector<8x10xf32>, vector<10x16xf32>, vector<8x16xf32> -> vector<8x16xf32>
    %6 = vector.broadcast %2 : vector<1x16xf32> to vector<8x16xf32>
    %7 = arith.addf %5, %6 : vector<8x16xf32>
    %cst_8 = arith.constant 0.000000e+00 : f32
    %8 = vector.broadcast %cst_8 : f32 to vector<8x16xf32>
    %9 = arith.maximumf %7, %8 : vector<8x16xf32>
    %cst_9 = arith.constant dense<0.000000e+00> : vector<8x8xf32>
    %10 = tpu.matmul %9, %3, %cst_9 {dimension_numbers = #tpu.dot_dimension_numbers<[1], [0], [0], [1], [0, 0, 1, 1], [], []>} : vector<8x16xf32>, vector<16x8xf32>, vector<8x8xf32> -> vector<8x8xf32>
    %11 = vector.broadcast %4 : vector<1x8xf32> to vector<8x8xf32>
    %12 = arith.addf %10, %11 : vector<8x8xf32>
    %c0_10 = arith.constant 0 : index
    %c0_11 = arith.constant 0 : index
    %13 = vector.load %arg4[%c0_10, %c0_11] : memref<8x8xf32, #tpu.memory_space<vmem>>, vector<8x8xf32>
    tpu.vector_store %arg4[%c0_10, %c0_11], %12 {strides = array<i32>} : memref<8x8xf32, #tpu.memory_space<vmem>>, vector<8x8xf32>,
    return
  }
  func.func @transform_0(%arg0: i32) -> (i32, i32) {
    %c0_i32 = arith.constant 0 : i32
    %c0_i32_0 = arith.constant 0 : i32
    return %arg0, %c0_i32 : i32, i32
  }
  func.func @transform_1(%arg0: i32) -> (i32, i32) {
    %c0_i32 = arith.constant 0 : i32
    %c0_i32_0 = arith.constant 0 : i32
    %c0_i32_1 = arith.constant 0 : i32
    return %c0_i32, %c0_i32_0 : i32, i32
  }
  func.func @transform_2(%arg0: i32) -> (i32, i32) {
    %c0_i32 = arith.constant 0 : i32
    %c0_i32_0 = arith.constant 0 : i32
    %c0_i32_1 = arith.constant 0 : i32
    return %c0_i32, %c0_i32_0 : i32, i32
  }
  func.func @transform_3(%arg0: i32) -> (i32, i32) {
    %c0_i32 = arith.constant 0 : i32
    %c0_i32_0 = arith.constant 0 : i32
    return %arg0, %c0_i32 : i32, i32
  }
}

</mosaic_0001>

<llo_original>
// kernel: tpu_custom_call.1
$region0: #{tpu_custom_call.1}
  #allocation0 [shape = 'u32[]', space=smem, size = 0x4, offset = 0x4, fixed_abs, tag = 'smem constant byte address 0x4 - core index']
  #allocation1 [shape = 'u32[144,128]{1,0:T(1,128)}', space=vmem, size = 0x12000, scoped, tag = 'internal scratch']
  %s0 = inlined_call_operand.vmem [shape: f32[8,10], index: 0, kind: input, shape index: {}]
  %s1 = inlined_call_operand.vmem [shape: f32[24,16], index: 1, kind: input, shape index: {}]
  %s2 = inlined_call_operand.vmem [shape: f32[24,8], index: 2, kind: input, shape index: {}]
  %s3 = inlined_call_operand.hbm [shape: f32[8,8], index: 3, kind: output, shape index: {}]
  %s4 = sld [smem:[#allocation0]]
  $region22: #{tpu_custom_call.1} parent=0
    _
  %s6 = ssub.s32 1, %s4
  %s7 = scalar_select 0, %s6, %s4
  $region1: #{tpu_custom_call.1} parent=0
    #allocation2 [shape = 'u8[4096]{0}', space=vmem, size = 0x1000, scoped, tag = 'output window, operand 0, single buffered']
    #allocation3 [shape = 's32[1]{0}', space=sflag, size = 0x4, scoped, tag = 'scoped memory for tpu_custom_call.1']
    %8 = vsyncpa [#allocation3], 0
    // Predicated region
    $region2: #{tpu_custom_call.1} parent=1 // pred_check
      _
    $region3: #{tpu_custom_call.1} parent=1 // pred_check_branch
      %10 = sbr.rel (0) target = $region5
    $region4: #{tpu_custom_call.1} parent=1 // pred_region
      _
    $region5: #{tpu_custom_call.1} parent=1 // pred_fallthru
      _
    // Predicated region
    $region6: #{tpu_custom_call.1} parent=1 // pred_check
      _
    $region7: #{tpu_custom_call.1} parent=1 // pred_check_branch
      %12 = sbr.rel (0) target = $region9
    $region8: #{tpu_custom_call.1} parent=1 // pred_region
      _
    $region9: #{tpu_custom_call.1} parent=1 // pred_fallthru
      _
    // Predicated region
    $region10: #{tpu_custom_call.1} parent=1 // pred_check
      _
    $region11: #{tpu_custom_call.1} parent=1 // pred_check_branch
      %14 = sbr.rel (0) target = $region13
    $region12: #{tpu_custom_call.1} parent=1 // pred_region
      _
    $region13: #{tpu_custom_call.1} parent=1 // pred_fallthru
      _
    %v15 = vld [vmem:[%s0] sm:$0xff]
    %v16 = vld [vmem:[%s1] sm:$0xff]
    %v17 = vld [vmem:[%s1 + $0x8] sm:$0x3]
    %v18 = vld [vmem:[%s1 + $0x10] sm:$0x1]
    %v19 = vld [vmem:[%s2] sm:$0xff]
    %v20 = vld [vmem:[%s2 + $0x8] sm:$0xff]
    %v21 = vld [vmem:[%s2 + $0x10] sm:$0x1]
    %v22 = vlaneseq
    %v23 = vshrl.u32 %v22, 7
    %v24 = vsub.s32 0, %v23
    %v25 = vrot.slane %v18, %v24
    %vm26 = vcmask 80896
    %v28 = vsel %vm26, %v15, 0
    %vm30 = vcmask 1041408
    %v32 = vsel %vm30, %v17, 0
    %34 = vmatprep.subr.mxu0 0.0
    %35 = vmatpush1.msra.mxu0 %v16
    %36 = vmatprep.subr.mxu0 0.0
    %37 = vmatpush1.msra.mxu0 %v32
    %38 = vmatprep.subr.mxu0 0.0
    %39 = vmatpush1.msra.mxu0 0.0
    %40 = vmatprep.subr.mxu0 0.0
    %41 = vmatpush1.msra.mxu0 0.0
    %42 = vmatprep.subr.mxu0 0.0
    %43 = vmatpush1.msra.mxu0 0.0
    %44 = vmatprep.subr.mxu0 0.0
    %45 = vmatpush1.msra.mxu0 0.0
    %46 = vmatprep.subr.mxu0 0.0
    %47 = vmatpush1.msra.mxu0 0.0
    %48 = vmatprep.subr.mxu0 0.0
    %49 = vmatpush1.msra.mxu0 0.0
    %50 = vmatprep.subr.mxu0 0.0
    %51 = vmatpush1.msra.mxu0 0.0
    %52 = vmatprep.subr.mxu0 0.0
    %53 = vmatpush1.msra.mxu0 0.0
    %54 = vmatprep.subr.mxu0 0.0
    %55 = vmatpush1.msra.mxu0 0.0
    %56 = vmatprep.subr.mxu0 0.0
    %57 = vmatpush1.msra.mxu0 0.0
    %58 = vmatprep.subr.mxu0 0.0
    %59 = vmatpush1.msra.mxu0 0.0
    %60 = vmatprep.subr.mxu0 0.0
    %61 = vmatpush1.msra.mxu0 0.0
    %62 = vmatprep.subr.mxu0 0.0
    %63 = vmatpush1.msra.mxu0 0.0
    %64 = vmatprep.subr.mxu0 0.0
    %65 = vmatpush1.msra.mxu0 0.0
    %66 = vmatprep.subr.mxu0 0.0
    %67 = vmatpush1.msra.mxu0 0.0
    %68 = vmatprep.subr.mxu0 0.0
    %69 = vmatpush1.msra.mxu0 0.0
    %70 = vmatprep.subr.mxu0 0.0
    %71 = vmatpush1.msra.mxu0 0.0
    %72 = vmatprep.subr.mxu0 0.0
    %73 = vmatpush1.msra.mxu0 0.0
    %74 = vmatprep.subr.mxu0 0.0
    %75 = vmatpush1.msra.mxu0 0.0
    %76 = vmatprep.subr.mxu0 0.0
    %77 = vmatpush1.msra.mxu0 0.0
    %78 = vmatprep.subr.mxu0 0.0
    %79 = vmatpush1.msra.mxu0 0.0
    %80 = vmatprep.subr.mxu0 0.0
    %81 = vmatpush1.msra.mxu0 0.0
    %82 = vmatprep.subr.mxu0 0.0
    %83 = vmatpush1.msra.mxu0 0.0
    %84 = vmatprep.subr.mxu0 0.0
    %85 = vmatpush1.msra.mxu0 0.0
    %86 = vmatprep.subr.mxu0 0.0
    %87 = vmatpush1.msra.mxu0 0.0
    %88 = vmatprep.subr.mxu0 0.0
    %89 = vmatpush1.msra.mxu0 0.0
    %90 = vmatprep.subr.mxu0 0.0
    %91 = vmatpush1.msra.mxu0 0.0
    %92 = vmatprep.subr.mxu0 0.0
    %93 = vmatpush1.msra.mxu0 0.0
    %94 = vmatprep.subr.mxu0 0.0
    %95 = vmatpush1.msra.mxu0 0.0
    %96 = vmatprep.subr.mxu0 0.0
    %97 = vmatpush1.msra.mxu0 0.0
    %98 = vmatprep.mubr.f32.mxu0 0.0
    %99 = vmatmul.mubr.f32.gmra.mrb[0].mxu0 %v28
    %v100 = vpop.f32.mrb[0].mxu0
    %v101 = vadd.f32 %v25, %v100
    %v102 = vpop.f32.mrb[0].mxu0
    %103 = vdwg.mxu0
    %v104 = vmax.f32 %v101, 0.0
    %v105 = vlaneseq
    %v106 = vshrl.u32 %v105, 7
    %v107 = vsub.s32 0, %v106
    %v108 = vrot.slane %v21, %v107
    %vm109 = vcmask 130048
    %v111 = vsel %vm109, %v104, 0
    %113 = vmatprep.subr.mxu0 0.0
    %114 = vmatpush1.msra.mxu0 %v19
    %115 = vmatprep.subr.mxu0 0.0
    %116 = vmatpush1.msra.mxu0 %v20
    %117 = vmatprep.subr.mxu0 0.0
    %118 = vmatpush1.msra.mxu0 0.0
    %119 = vmatprep.subr.mxu0 0.0
    %120 = vmatpush1.msra.mxu0 0.0
    %121 = vmatprep.subr.mxu0 0.0
    %122 = vmatpush1.msra.mxu0 0.0
    %123 = vmatprep.subr.mxu0 0.0
    %124 = vmatpush1.msra.mxu0 0.0
    %125 = vmatprep.subr.mxu0 0.0
    %126 = vmatpush1.msra.mxu0 0.0
    %127 = vmatprep.subr.mxu0 0.0
    %128 = vmatpush1.msra.mxu0 0.0
    %129 = vmatprep.subr.mxu0 0.0
    %130 = vmatpush1.msra.mxu0 0.0
    %131 = vmatprep.subr.mxu0 0.0
    %132 = vmatpush1.msra.mxu0 0.0
    %133 = vmatprep.subr.mxu0 0.0
    %134 = vmatpush1.msra.mxu0 0.0
    %135 = vmatprep.subr.mxu0 0.0
    %136 = vmatpush1.msra.mxu0 0.0
    %137 = vmatprep.subr.mxu0 0.0
    %138 = vmatpush1.msra.mxu0 0.0
    %139 = vmatprep.subr.mxu0 0.0
    %140 = vmatpush1.msra.mxu0 0.0
    %141 = vmatprep.subr.mxu0 0.0
    %142 = vmatpush1.msra.mxu0 0.0
    %143 = vmatprep.subr.mxu0 0.0
    %144 = vmatpush1.msra.mxu0 0.0
    %145 = vmatprep.subr.mxu0 0.0
    %146 = vmatpush1.msra.mxu0 0.0
    %147 = vmatprep.subr.mxu0 0.0
    %148 = vmatpush1.msra.mxu0 0.0
    %149 = vmatprep.subr.mxu0 0.0
    %150 = vmatpush1.msra.mxu0 0.0
    %151 = vmatprep.subr.mxu0 0.0
    %152 = vmatpush1.msra.mxu0 0.0
    %153 = vmatprep.subr.mxu0 0.0
    %154 = vmatpush1.msra.mxu0 0.0
    %155 = vmatprep.subr.mxu0 0.0
    %156 = vmatpush1.msra.mxu0 0.0
    %157 = vmatprep.subr.mxu0 0.0
    %158 = vmatpush1.msra.mxu0 0.0
    %159 = vmatprep.subr.mxu0 0.0
    %160 = vmatpush1.msra.mxu0 0.0
    %161 = vmatprep.subr.mxu0 0.0
    %162 = vmatpush1.msra.mxu0 0.0
    %163 = vmatprep.subr.mxu0 0.0
    %164 = vmatpush1.msra.mxu0 0.0
    %165 = vmatprep.subr.mxu0 0.0
    %166 = vmatpush1.msra.mxu0 0.0
    %167 = vmatprep.subr.mxu0 0.0
    %168 = vmatpush1.msra.mxu0 0.0
    %169 = vmatprep.subr.mxu0 0.0
    %170 = vmatpush1.msra.mxu0 0.0
    %171 = vmatprep.subr.mxu0 0.0
    %172 = vmatpush1.msra.mxu0 0.0
    %173 = vmatprep.subr.mxu0 0.0
    %174 = vmatpush1.msra.mxu0 0.0
    %175 = vmatprep.subr.mxu0 0.0
    %176 = vmatpush1.msra.mxu0 0.0
    %177 = vmatprep.mubr.f32.mxu0 0.0
    %178 = vmatmul.mubr.f32.gmra.mrb[0].mxu0 %v111
    %v179 = vpop.f32.mrb[0].mxu0
    %v180 = vadd.f32 %v108, %v179
    %v181 = vpop.f32.mrb[0].mxu0
    %182 = vdwg.mxu0
    %vm183 = vcmask 64512
    %184 = vst.msk [vmem:[#allocation2] sm:$0xff] %vm183, %v180
    // Predicated region
    $region14: #{tpu_custom_call.1} parent=1 // pred_check
      _
    $region15: #{tpu_custom_call.1} parent=1 // pred_check_branch
      %186 = sbr.rel (0) target = $region17
    $region16: #{tpu_custom_call.1} parent=1 // pred_region
      %s188 = ssub.s32 128, 128
      %189 = vsyncadd [#allocation3], %s188
      %s191 = sshll.u32 [#allocation2], 4
      %s192 = int_to_ptr.vmem [resolvable:$true] %s191
      %194 = dma.vmem_to_hbm [thread:$0]  %s192, 128, %s3, [#allocation3]
    $region17: #{tpu_custom_call.1} parent=1 // pred_fallthru
      _
    // Predicated region
    $region18: #{tpu_custom_call.1} parent=1 // pred_check
      _
    $region19: #{tpu_custom_call.1} parent=1 // pred_check_branch
      %196 = sbr.rel (0) target = $region21
    $region20: #{tpu_custom_call.1} parent=1 // pred_region
      %197 = dma.done [#allocation3], 128
    $region21: #{tpu_custom_call.1} parent=1 // pred_fallthru
      _
    %198 = vsyncpa [#allocation3], 1

</llo_original>
